<compile_context>
chip_gen: v7x
topology: tpu7x:2x2x1
jax: 0.10.0
libtpu: 0.0.40
codegen_flags: <defaults>
</compile_context>

<pallas_src>
import functools

import jax
import jax.numpy as jnp
from jax.experimental import pallas as pl
from jax.experimental.pallas import tpu as pltpu

_LANE = 128


def _round_up(n, m):
    return ((n + m - 1) // m) * m


def _encoder_kernel(x_ref, w1_ref, b1_ref, wh_ref, bh_ref, out_ref, *, d_out):
    x = x_ref[...]                                               # [tb, d_in]

    # first = x @ W1 + b1   (hidden dim zero-padded to a lane multiple)
    first = jnp.dot(x, w1_ref[...], preferred_element_type=jnp.float32)
    first = first + b1_ref[...]                                  # [tb, d_hid_p]
    t = jnp.tanh(first)

    # Fused head matmul:
    #   columns [0, d_out)  -> hashing logits
    #   column  d_out       -> ifnew logit
    #   remaining columns   -> zero padding (lane-dense output slab)
    z = jnp.dot(t, wh_ref[...], preferred_element_type=jnp.float32)
    z = z + bh_ref[...]                                          # [tb, n_head]

    col = jax.lax.broadcasted_iota(jnp.int32, z.shape, dimension=1)
    # sigmoid on the hashing columns, identity on the ifnew column; padding
    # columns are sliced away in the wrapper so their value is irrelevant.
    out_ref[...] = jnp.where(col == d_out, z, jax.nn.sigmoid(z))


@functools.partial(jax.jit, static_argnames=("block_b",))
def encoder_m_forward(x, params, block_b=1024):
    """Fused EncoderM forward.  x: [B, dim_In] float32 -> (ifnew, hashing)."""
    w1, b1 = params["w1"], params["b1"]
    wif, bif = params["wif"], params["bif"]
    wh, bh = params["wh"], params["bh"]

    B, d_in = x.shape
    d_hid = w1.shape[1]
    d_out = wh.shape[1]

    # ---- weight prep (tiny, done once per jit trace) ----------------------
    # Pad hidden dim to a lane multiple so the intermediate is lane-dense.
    d_hid_p = _round_up(d_hid, _LANE)
    w1_p = jnp.zeros((d_in, d_hid_p), jnp.float32).at[:, :d_hid].set(w1)
    b1_p = jnp.zeros((1, d_hid_p), jnp.float32).at[:, :d_hid].set(b1)

    # Fuse both heads into one lane-padded weight / bias.
    n_head = _round_up(d_out + 1, _LANE)
    w_head = jnp.zeros((d_hid_p, n_head), jnp.float32)
    w_head = w_head.at[:d_hid, :d_out].set(wh)
    w_head = w_head.at[:d_hid, d_out:d_out + 1].set(wif)
    b_head = jnp.zeros((1, n_head), jnp.float32)
    b_head = b_head.at[:, :d_out].set(bh)
    b_head = b_head.at[:, d_out:d_out + 1].set(bif)

    # ---- batch tiling ------------------------------------------------------
    # Large tiles amortize the ~0.35 us / grid-step overhead; cap at the
    # (8-aligned) batch and pad the batch so no assert / masked tail needed.
    tb = min(block_b, _round_up(B, 8))
    tb = _round_up(tb, 8)
    B_pad = _round_up(B, tb)
    if B_pad != B:
        x = jnp.pad(x, ((0, B_pad - B), (0, 0)))

    grid = (B_pad // tb,)

    rep = lambda shape: pl.BlockSpec(shape, lambda i: (0, 0))

    slab = pl.pallas_call(
        functools.partial(_encoder_kernel, d_out=d_out),
        out_shape=jax.ShapeDtypeStruct((B_pad, n_head), jnp.float32),
        grid_spec=pltpu.PrefetchScalarGridSpec(
            num_scalar_prefetch=0,
            grid=grid,
            in_specs=[
                pl.BlockSpec((tb, d_in), lambda i: (i, 0)),   # x tile
                rep((d_in, d_hid_p)),                          # w1 (lane-padded)
                rep((1, d_hid_p)),                             # b1 (lane-padded)
                rep((d_hid_p, n_head)),                        # fused head W
                rep((1, n_head)),                              # fused head b
            ],
            out_specs=pl.BlockSpec((tb, n_head), lambda i: (i, 0)),
        ),
        compiler_params=pltpu.CompilerParams(
            dimension_semantics=("parallel",)),
    )(x, w1_p, b1_p, w_head, b_head)

    ifnew = slab[:B, d_out:d_out + 1]
    hashing = slab[:B, :d_out]
    return ifnew, hashing


def init_params(key, dim_in, dim_hid, dim_out):
    """Deterministic init mimicking nn.Linear's U(-1/sqrt(fan_in), +...)."""
    ks = jax.random.split(key, 6)

    def lin(kw, kb, fan_in, fan_out):
        bound = 1.0 / jnp.sqrt(fan_in)
        w = jax.random.uniform(kw, (fan_in, fan_out), jnp.float32, -bound, bound)
        b = jax.random.uniform(kb, (1, fan_out), jnp.float32, -bound, bound)
        return w, b

    w1, b1 = lin(ks[0], ks[1], dim_in, dim_hid)
    wif, bif = lin(ks[2], ks[3], dim_hid, 1)
    wh, bh = lin(ks[4], ks[5], dim_hid, dim_out)
    return {"w1": w1, "b1": b1, "wif": wif, "bif": bif, "wh": wh, "bh": bh}


def encoder_m_reference(x, p):
    first = x @ p["w1"] + p["b1"]
    t = jnp.tanh(first)
    ifnew = t @ p["wif"] + p["bif"]
    hashing = jax.nn.sigmoid(t @ p["wh"] + p["bh"])
    return ifnew, hashing


if __name__ == "__main__":
    dim_in, dim_hid, dim_out = 32, 32, 16
    batch = 256           # small demo size; block_b=128 -> 2 grid steps

    key = jax.random.PRNGKey(0)
    kx, kp = jax.random.split(key)
    x = jax.random.normal(kx, (batch, dim_in), jnp.float32)
    params = init_params(kp, dim_in, dim_hid, dim_out)

    ifnew, hashing = encoder_m_forward(x, params, block_b=128)
    jax.block_until_ready((ifnew, hashing))

    ifnew_ref, hashing_ref = encoder_m_reference(x, params)
    assert ifnew.shape == (batch, 1) and hashing.shape == (batch, dim_out)
    assert jnp.allclose(ifnew, ifnew_ref, atol=1e-5, rtol=1e-5)
    assert jnp.allclose(hashing, hashing_ref, atol=1e-5, rtol=1e-5)

    # Non-divisible batch + default (large) tile path also exercised.
    x2 = jax.random.normal(kx, (100, dim_in), jnp.float32)
    i2, h2 = encoder_m_forward(x2, params)
    jax.block_until_ready((i2, h2))
    i2_ref, h2_ref = encoder_m_reference(x2, params)
    assert jnp.allclose(i2, i2_ref, atol=1e-5, rtol=1e-5)
    assert jnp.allclose(h2, h2_ref, atol=1e-5, rtol=1e-5)

    print("KERNEL_OK")
</pallas_src>

<mosaic_0001>
module attributes {stable_mosaic.version = 11 : i64} {
  func.func @_encoder_kernel(%arg0: i32, %arg1: memref<128x32xf32, #tpu.memory_space<vmem>>, %arg2: memref<32x128xf32, #tpu.memory_space<vmem>>, %arg3: memref<1x128xf32, #tpu.memory_space<vmem>>, %arg4: memref<128x128xf32, #tpu.memory_space<vmem>>, %arg5: memref<1x128xf32, #tpu.memory_space<vmem>>, %arg6: memref<128x128xf32, #tpu.memory_space<vmem>>) attributes {dimension_semantics = [#tpu.dimension_semantics<parallel>], iteration_bounds = array<i64: 2>, scalar_prefetch = 0 : i64, scratch_operands = 0 : i64, tpu.core_type = #tpu.core_type<tc>, window_params = [{transform_indices = @transform_0, window_bounds = array<i64: 128, 32>}, {pipeline_mode = #tpu.pipeline_mode<synchronous>, transform_indices = @transform_1, window_bounds = array<i64: 32, 128>}, {pipeline_mode = #tpu.pipeline_mode<synchronous>, transform_indices = @transform_2, window_bounds = array<i64: 1, 128>}, {pipeline_mode = #tpu.pipeline_mode<synchronous>, transform_indices = @transform_3, window_bounds = array<i64: 128, 128>}, {pipeline_mode = #tpu.pipeline_mode<synchronous>, transform_indices = @transform_4, window_bounds = array<i64: 1, 128>}, {transform_indices = @transform_5, window_bounds = array<i64: 128, 128>}]} {
    %c0 = arith.constant 0 : index
    %c0_0 = arith.constant 0 : index
    %0 = vector.load %arg1[%c0, %c0_0] : memref<128x32xf32, #tpu.memory_space<vmem>>, vector<128x32xf32>
    %c0_1 = arith.constant 0 : index
    %c0_2 = arith.constant 0 : index
    %1 = vector.load %arg2[%c0_1, %c0_2] : memref<32x128xf32, #tpu.memory_space<vmem>>, vector<32x128xf32>
    %cst = arith.constant dense<0.000000e+00> : vector<128x128xf32>
    %2 = tpu.matmul %0, %1, %cst {dimension_numbers = #tpu.dot_dimension_numbers<[1], [0], [0], [1], [0, 0, 1, 1], [], []>} : vector<128x32xf32>, vector<32x128xf32>, vector<128x128xf32> -> vector<128x128xf32>
    %c0_3 = arith.constant 0 : index
    %c0_4 = arith.constant 0 : index
    %3 = vector.load %arg3[%c0_3, %c0_4] : memref<1x128xf32, #tpu.memory_space<vmem>>, vector<1x128xf32>
    %4 = vector.broadcast %3 : vector<1x128xf32> to vector<128x128xf32>
    %5 = arith.addf %2, %4 : vector<128x128xf32>
    %6 = math.tanh %5 : vector<128x128xf32>
    %c0_5 = arith.constant 0 : index
    %c0_6 = arith.constant 0 : index
    %7 = vector.load %arg4[%c0_5, %c0_6] : memref<128x128xf32, #tpu.memory_space<vmem>>, vector<128x128xf32>
    %cst_7 = arith.constant dense<0.000000e+00> : vector<128x128xf32>
    %8 = tpu.matmul %6, %7, %cst_7 {dimension_numbers = #tpu.dot_dimension_numbers<[1], [0], [0], [1], [0, 0, 1, 1], [], []>} : vector<128x128xf32>, vector<128x128xf32>, vector<128x128xf32> -> vector<128x128xf32>
    %c0_8 = arith.constant 0 : index
    %c0_9 = arith.constant 0 : index
    %9 = vector.load %arg5[%c0_8, %c0_9] : memref<1x128xf32, #tpu.memory_space<vmem>>, vector<1x128xf32>
    %10 = vector.broadcast %9 : vector<1x128xf32> to vector<128x128xf32>
    %11 = arith.addf %8, %10 : vector<128x128xf32>
    %12 = tpu.iota {dimensions = array<i32: 1>} : vector<128x128xi32>
    %c16_i32 = arith.constant 16 : i32
    %13 = vector.broadcast %c16_i32 : i32 to vector<128x128xi32>
    %14 = arith.cmpi eq, %12, %13 : vector<128x128xi32>
    %15 = arith.negf %11 : vector<128x128xf32>
    %16 = math.exp %15 : vector<128x128xf32>
    %cst_10 = arith.constant 1.000000e+00 : f32
    %17 = vector.broadcast %cst_10 : f32 to vector<128x128xf32>
    %18 = arith.addf %17, %16 : vector<128x128xf32>
    %19 = arith.divf %17, %18 : vector<128x128xf32>
    %20 = arith.select %14, %11, %19 : vector<128x128xi1>, vector<128x128xf32>
    %c0_11 = arith.constant 0 : index
    %c0_12 = arith.constant 0 : index
    %21 = vector.load %arg6[%c0_11, %c0_12] : memref<128x128xf32, #tpu.memory_space<vmem>>, vector<128x128xf32>
    tpu.vector_store %arg6[%c0_11, %c0_12], %20 {strides = array<i32>} : memref<128x128xf32, #tpu.memory_space<vmem>>, vector<128x128xf32>,
    return
  }
  func.func @transform_0(%arg0: i32) -> (i32, i32) {
    %c0_i32 = arith.constant 0 : i32
    %c0_i32_0 = arith.constant 0 : i32
    return %arg0, %c0_i32 : i32, i32
  }
  func.func @transform_1(%arg0: i32) -> (i32, i32) {
    %c0_i32 = arith.constant 0 : i32
    %c0_i32_0 = arith.constant 0 : i32
    %c0_i32_1 = arith.constant 0 : i32
    return %c0_i32, %c0_i32_0 : i32, i32
  }
  func.func @transform_2(%arg0: i32) -> (i32, i32) {
    %c0_i32 = arith.constant 0 : i32
    %c0_i32_0 = arith.constant 0 : i32
    %c0_i32_1 = arith.constant 0 : i32
    return %c0_i32, %c0_i32_0 : i32, i32
  }
  func.func @transform_3(%arg0: i32) -> (i32, i32) {
    %c0_i32 = arith.constant 0 : i32
    %c0_i32_0 = arith.constant 0 : i32
    %c0_i32_1 = arith.constant 0 : i32
    return %c0_i32, %c0_i32_0 : i32, i32
  }
  func.func @transform_4(%arg0: i32) -> (i32, i32) {
    %c0_i32 = arith.constant 0 : i32
    %c0_i32_0 = arith.constant 0 : i32
    %c0_i32_1 = arith.constant 0 : i32
    return %c0_i32, %c0_i32_0 : i32, i32
  }
  func.func @transform_5(%arg0: i32) -> (i32, i32) {
    %c0_i32 = arith.constant 0 : i32
    %c0_i32_0 = arith.constant 0 : i32
    return %arg0, %c0_i32 : i32, i32
  }
}

</mosaic_0001>

<llo_original>
// kernel: encoder_m_forward.1
$region0: #{encoder_m_forward.1}
  #allocation0 [shape = 'u32[]', space=smem, size = 0x4, offset = 0x4, fixed_abs, tag = 'smem constant byte address 0x4 - core index']
  #allocation1 [shape = 'u32[144,128]{1,0:T(1,128)}', space=vmem, size = 0x12000, scoped, tag = 'internal scratch']
  %s0 = inlined_call_operand.vmem [shape: f32[256,32], index: 0, kind: input, shape index: {}]
  %s1 = inlined_call_operand.vmem [shape: f32[32,128], index: 1, kind: input, shape index: {}]
  %s2 = inlined_call_operand.vmem [shape: f32[1,128], index: 2, kind: input, shape index: {}]
  %s3 = inlined_call_operand.vmem [shape: f32[128,128], index: 3, kind: input, shape index: {}]
  %s4 = inlined_call_operand.vmem [shape: f32[1,128], index: 4, kind: input, shape index: {}]
  %s5 = inlined_call_operand.vmem [shape: f32[256,128], index: 5, kind: output, shape index: {}]
  %s6 = sld [smem:[#allocation0]]
  $region53: #{encoder_m_forward.1} parent=0
    _
  %s8 = ssub.s32 1, %s6
  %s9 = scalar_select 0, %s8, %s6
  loop: start=0, step=1, limit=4
  $region2: #{encoder_m_forward.1} parent=0 // loop_pre_header
    _
  $region3: #{encoder_m_forward.1} parent=0 // loop_header
    %s11 = sphi 0, %s15
    %p12 = scmp.ge.s32.totalorder %s11, 4
    %s21 = sphi 0, %s23
    %s24 = sphi 0, %s21
    %s25 = sphi 0, %s24
    %s41 = sphi 0, %s25
    %s45 = sphi 0, %s45
    %s47 = sphi 0, %s45
    %s48 = sphi 0, %s47
    %s62 = sphi 0, %s48
    %s66 = sphi 0, %s66
    %s68 = sphi 0, %s66
    %s69 = sphi 0, %s68
    %s83 = sphi 0, %s69
    %s87 = sphi 0, %s87
    %s89 = sphi 0, %s87
    %s90 = sphi 0, %s89
    %s104 = sphi 0, %s90
    %s108 = sphi 0, %s108
    %s110 = sphi 0, %s108
    %s111 = sphi 0, %s110
    %s125 = sphi 0, %s111
    %s131 = sphi 0, %s133
    %s134 = sphi 0, %s131
    %s135 = sphi 0, %s134
    %s151 = sphi 0, %s135
  $region4: #{encoder_m_forward.1} parent=0 // loop_header_branch
    %14 = sbr.rel (%p12) target = $region8
  $region5: #{encoder_m_forward.1} parent=0 // loop_body
    %s16 = ssub.s32 %s11, 1
    %s17 = ssub.s32 %s11, 2
    %s18 = sadd.s32 %s11, 1
    %s19 = ssub.s32 %s11, %s18
    %p20 = scmp.eq.s32.totalorder %s19, 0
    %s22 = sadd.s32 %s21, 1
    %s23 = scalar_select %p20, %s21, %s22
    %p26 = pneg %p20
    %p27 = scmp.eq.s32.totalorder %s11, 1
    %p28 = por %p26, %p27
    %p29 = scmp.ne.s32.totalorder %s21, %s24
    %p30 = scmp.eq.s32.totalorder %s11, 0
    %p31 = por %p29, %p30
    %p32 = scmp.ne.s32.totalorder %s21, %s24
    %p33 = scmp.eq.s32.totalorder %s16, 1
    %p34 = por %p32, %p33
    %p35 = scmp.ne.s32.totalorder %s24, %s25
    %p36 = scmp.eq.s32.totalorder %s16, 0
    %p37 = por %p35, %p36
    %p38 = scmp.ne.s32.totalorder %s24, %s25
    %p39 = scmp.eq.s32.totalorder %s17, 1
    %p40 = por %p38, %p39
    %p42 = scmp.ne.s32.totalorder %s25, %s41
    %p43 = scmp.eq.s32.totalorder %s17, 0
    %p44 = por %p42, %p43
    %s46 = sadd.s32 %s45, 1
    %p49 = scmp.eq.s32.totalorder %s11, 1
    %p50 = scmp.ne.s32.totalorder %s45, %s47
    %p51 = scmp.eq.s32.totalorder %s11, 0
    %p52 = por %p50, %p51
    %p53 = scmp.ne.s32.totalorder %s45, %s47
    %p54 = scmp.eq.s32.totalorder %s16, 1
    %p55 = por %p53, %p54
    %p56 = scmp.ne.s32.totalorder %s47, %s48
    %p57 = scmp.eq.s32.totalorder %s16, 0
    %p58 = por %p56, %p57
    %p59 = scmp.ne.s32.totalorder %s47, %s48
    %p60 = scmp.eq.s32.totalorder %s17, 1
    %p61 = por %p59, %p60
    %p63 = scmp.ne.s32.totalorder %s48, %s62
    %p64 = scmp.eq.s32.totalorder %s17, 0
    %p65 = por %p63, %p64
    %s67 = sadd.s32 %s66, 1
    %p70 = scmp.eq.s32.totalorder %s11, 1
    %p71 = scmp.ne.s32.totalorder %s66, %s68
    %p72 = scmp.eq.s32.totalorder %s11, 0
    %p73 = por %p71, %p72
    %p74 = scmp.ne.s32.totalorder %s66, %s68
    %p75 = scmp.eq.s32.totalorder %s16, 1
    %p76 = por %p74, %p75
    %p77 = scmp.ne.s32.totalorder %s68, %s69
    %p78 = scmp.eq.s32.totalorder %s16, 0
    %p79 = por %p77, %p78
    %p80 = scmp.ne.s32.totalorder %s68, %s69
    %p81 = scmp.eq.s32.totalorder %s17, 1
    %p82 = por %p80, %p81
    %p84 = scmp.ne.s32.totalorder %s69, %s83
    %p85 = scmp.eq.s32.totalorder %s17, 0
    %p86 = por %p84, %p85
    %s88 = sadd.s32 %s87, 1
    %p91 = scmp.eq.s32.totalorder %s11, 1
    %p92 = scmp.ne.s32.totalorder %s87, %s89
    %p93 = scmp.eq.s32.totalorder %s11, 0
    %p94 = por %p92, %p93
    %p95 = scmp.ne.s32.totalorder %s87, %s89
    %p96 = scmp.eq.s32.totalorder %s16, 1
    %p97 = por %p95, %p96
    %p98 = scmp.ne.s32.totalorder %s89, %s90
    %p99 = scmp.eq.s32.totalorder %s16, 0
    %p100 = por %p98, %p99
    %p101 = scmp.ne.s32.totalorder %s89, %s90
    %p102 = scmp.eq.s32.totalorder %s17, 1
    %p103 = por %p101, %p102
    %p105 = scmp.ne.s32.totalorder %s90, %s104
    %p106 = scmp.eq.s32.totalorder %s17, 0
    %p107 = por %p105, %p106
    %s109 = sadd.s32 %s108, 1
    %p112 = scmp.eq.s32.totalorder %s11, 1
    %p113 = scmp.ne.s32.totalorder %s108, %s110
    %p114 = scmp.eq.s32.totalorder %s11, 0
    %p115 = por %p113, %p114
    %p116 = scmp.ne.s32.totalorder %s108, %s110
    %p117 = scmp.eq.s32.totalorder %s16, 1
    %p118 = por %p116, %p117
    %p119 = scmp.ne.s32.totalorder %s110, %s111
    %p120 = scmp.eq.s32.totalorder %s16, 0
    %p121 = por %p119, %p120
    %p122 = scmp.ne.s32.totalorder %s110, %s111
    %p123 = scmp.eq.s32.totalorder %s17, 1
    %p124 = por %p122, %p123
    %p126 = scmp.ne.s32.totalorder %s111, %s125
    %p127 = scmp.eq.s32.totalorder %s17, 0
    %p128 = por %p126, %p127
    %s129 = ssub.s32 %s11, %s18
    %p130 = scmp.eq.s32.totalorder %s129, 0
    %s132 = sadd.s32 %s131, 1
    %s133 = scalar_select %p130, %s131, %s132
    %p136 = pneg %p130
    %p137 = scmp.eq.s32.totalorder %s11, 1
    %p138 = por %p136, %p137
    %p139 = scmp.ne.s32.totalorder %s131, %s134
    %p140 = scmp.eq.s32.totalorder %s11, 0
    %p141 = por %p139, %p140
    %p142 = scmp.ne.s32.totalorder %s131, %s134
    %p143 = scmp.eq.s32.totalorder %s16, 1
    %p144 = por %p142, %p143
    %p145 = scmp.ne.s32.totalorder %s134, %s135
    %p146 = scmp.eq.s32.totalorder %s16, 0
    %p147 = por %p145, %p146
    %p148 = scmp.ne.s32.totalorder %s134, %s135
    %p149 = scmp.eq.s32.totalorder %s17, 1
    %p150 = por %p148, %p149
    %p152 = scmp.ne.s32.totalorder %s135, %s151
    %p153 = scmp.eq.s32.totalorder %s17, 0
    %p154 = por %p152, %p153
    %p155 = scmp.le.s32.totalorder 1, %s11
    %p156 = scmp.lt.s32.totalorder %s11, 3
    %p157 = pnand %p155, %p156
    %p158 = pneg %p157
    // Predicated region
    $region9: #{encoder_m_forward.1} parent=5 // pred_check
      _
    $region10: #{encoder_m_forward.1} parent=5 // pred_check_branch
      %160 = sbr.rel (%p157) target = $region12
    $region11: #{encoder_m_forward.1} parent=5 // pred_region
      %s161 = ssub.s32 %s11, 1
      // Predicated region
      $region13: #{encoder_m_forward.1} parent=11 // pred_check
        %p162 = pneg %p58
      $region14: #{encoder_m_forward.1} parent=11 // pred_check_branch
        %164 = sbr.rel (%p162) target = $region16
      $region15: #{encoder_m_forward.1} parent=11 // pred_region
        _
      $region16: #{encoder_m_forward.1} parent=11 // pred_fallthru
        _
      // Predicated region
      $region17: #{encoder_m_forward.1} parent=11 // pred_check
        %p165 = pneg %p79
      $region18: #{encoder_m_forward.1} parent=11 // pred_check_branch
        %167 = sbr.rel (%p165) target = $region20
      $region19: #{encoder_m_forward.1} parent=11 // pred_region
        _
      $region20: #{encoder_m_forward.1} parent=11 // pred_fallthru
        _
      // Predicated region
      $region21: #{encoder_m_forward.1} parent=11 // pred_check
        %p168 = pneg %p100
      $region22: #{encoder_m_forward.1} parent=11 // pred_check_branch
        %170 = sbr.rel (%p168) target = $region24
      $region23: #{encoder_m_forward.1} parent=11 // pred_region
        _
      $region24: #{encoder_m_forward.1} parent=11 // pred_fallthru
        _
      // Predicated region
      $region25: #{encoder_m_forward.1} parent=11 // pred_check
        %p171 = pneg %p121
      $region26: #{encoder_m_forward.1} parent=11 // pred_check_branch
        %173 = sbr.rel (%p171) target = $region28
      $region27: #{encoder_m_forward.1} parent=11 // pred_region
        _
      $region28: #{encoder_m_forward.1} parent=11 // pred_fallthru
        _
    $region12: #{encoder_m_forward.1} parent=5 // pred_fallthru
      _
    %p174 = scmp.lt.s32.totalorder %s11, 2
    // Predicated region
    $region29: #{encoder_m_forward.1} parent=5 // pred_check
      %p175 = pneg %p174
    $region30: #{encoder_m_forward.1} parent=5 // pred_check_branch
      %177 = sbr.rel (%p175) target = $region32
    $region31: #{encoder_m_forward.1} parent=5 // pred_region
      // Predicated region
      $region33: #{encoder_m_forward.1} parent=31 // pred_check
        %p178 = pneg %p31
      $region34: #{encoder_m_forward.1} parent=31 // pred_check_branch
        %180 = sbr.rel (%p178) target = $region36
      $region35: #{encoder_m_forward.1} parent=31 // pred_region
        %s181 = smul.u32 16, %s11
        %p182 = scmp.lt.s32.totalorder %s181, 31
        %s183 = scalar_select %p182, %s181, 31
        %s184 = smul.addr %s183, 8
        %s185 = scalar_lea.vmem %s0, %s184
        %s186 = smul.u32 16, %s11
      $region36: #{encoder_m_forward.1} parent=31 // pred_fallthru
        _
    $region32: #{encoder_m_forward.1} parent=5 // pred_fallthru
      _
    %p187 = scmp.le.s32.totalorder 1, %s11
    %p188 = scmp.lt.s32.totalorder %s11, 3
    %p189 = pnand %p187, %p188
    %p190 = pneg %p189
    // Predicated region
    $region37: #{encoder_m_forward.1} parent=5 // pred_check
      _
    $region38: #{encoder_m_forward.1} parent=5 // pred_check_branch
      %192 = sbr.rel (%p189) target = $region40
    $region39: #{encoder_m_forward.1} parent=5 // pred_region
      %s193 = ssub.s32 %s11, 1
      %s194 = smul.u32 16, %s16
      %p195 = scmp.lt.s32.totalorder %s194, 31
      %s196 = scalar_select %p195, %s194, 31
      %s197 = smul.addr %s196, 8
      %s198 = scalar_lea.vmem %s0, %s197
      %p199 = pneg %p37
      %p200 = pneg %p34
      %p201 = pneg %p58
      %p202 = pneg %p55
      %p203 = pneg %p79
      %p204 = pneg %p76
      %p205 = pneg %p100
      %p206 = pneg %p97
      %p207 = pneg %p121
      %p208 = pneg %p118
      %p209 = pneg %p147
      %p210 = pneg %p144
      %s211 = smul.u32 16, %s16
      %p212 = scmp.lt.s32.totalorder %s211, 31
      %s213 = scalar_select %p212, %s211, 31
      %s214 = smul.addr %s213, 8
      %s215 = scalar_lea.vmem %s5, %s214
      %s216 = smul.u32 16, %s16
      %p217 = scmp.lt.s32.totalorder %s216, 31
      %s218 = scalar_select %p217, %s216, 31
      %s219 = smul.addr %s218, 8
      %s220 = scalar_lea.vmem %s0, %s219
      %s221 = smul.u32 16, %s16
      %s222 = smul.u32 16, %s16
      %p223 = scmp.lt.s32.totalorder %s222, 31
      %s224 = scalar_select %p223, %s222, 31
      %s225 = smul.addr %s224, 8
      %s226 = scalar_lea.vmem %s5, %s225
      %s227 = smul.u32 16, %s16
      %v228 = vld [vmem:[%s220] sm:$0xff]
      %v229 = vld [vmem:[%s220 + $0x8] sm:$0xff]
      %v230 = vld [vmem:[%s220 + $0x10] sm:$0xff]
      %v231 = vld [vmem:[%s220 + $0x18] sm:$0xff]
      %v232 = vld [vmem:[%s220 + $0x20] sm:$0xff]
      %v233 = vld [vmem:[%s220 + $0x28] sm:$0xff]
      %v234 = vld [vmem:[%s220 + $0x30] sm:$0xff]
      %v235 = vld [vmem:[%s220 + $0x38] sm:$0xff]
      %v236 = vld [vmem:[%s220 + $0x40] sm:$0xff]
      %v237 = vld [vmem:[%s220 + $0x48] sm:$0xff]
      %v238 = vld [vmem:[%s220 + $0x50] sm:$0xff]
      %v239 = vld [vmem:[%s220 + $0x58] sm:$0xff]
      %v240 = vld [vmem:[%s220 + $0x60] sm:$0xff]
      %v241 = vld [vmem:[%s220 + $0x68] sm:$0xff]
      %v242 = vld [vmem:[%s220 + $0x70] sm:$0xff]
      %v243 = vld [vmem:[%s220 + $0x78] sm:$0xff]
      %v244 = vld [vmem:[%s1] sm:$0xff]
      %v245 = vld [vmem:[%s1 + $0x8] sm:$0xff]
      %v246 = vld [vmem:[%s1 + $0x10] sm:$0xff]
      %v247 = vld [vmem:[%s1 + $0x18] sm:$0xff]
      %v248 = vld [vmem:[%s2] sm:$0x1]
      %v250 = vlaneseq
      %v251 = vshrl.u32 %v250, 7
      %v252 = vsub.s32 0, %v251
      %v253 = vrot.slane %v248, %v252
      %vm255 = vcmask 261120
      %v257 = vsel %vm255, %v228, 0
      %v260 = vsel %vm255, %v229, 0
      %v263 = vsel %vm255, %v230, 0
      %v266 = vsel %vm255, %v231, 0
      %v269 = vsel %vm255, %v232, 0
      %v272 = vsel %vm255, %v233, 0
      %v275 = vsel %vm255, %v234, 0
      %v278 = vsel %vm255, %v235, 0
      %v281 = vsel %vm255, %v236, 0
      %v284 = vsel %vm255, %v237, 0
      %v287 = vsel %vm255, %v238, 0
      %v290 = vsel %vm255, %v239, 0
      %v293 = vsel %vm255, %v240, 0
      %v296 = vsel %vm255, %v241, 0
      %v299 = vsel %vm255, %v242, 0
      %v302 = vsel %vm255, %v243, 0
      %304 = vmatprep.subr.mxu0 0.0
      %305 = vmatpush1.msra.mxu0 %v244
      %306 = vmatprep.subr.mxu0 0.0
      %307 = vmatpush1.msra.mxu0 %v245
      %308 = vmatprep.subr.mxu0 0.0
      %309 = vmatpush1.msra.mxu0 %v246
      %310 = vmatprep.subr.mxu0 0.0
      %311 = vmatpush1.msra.mxu0 %v247
      %312 = vmatprep.subr.mxu0 0.0
      %313 = vmatpush1.msra.mxu0 0.0
      %314 = vmatprep.subr.mxu0 0.0
      %315 = vmatpush1.msra.mxu0 0.0
      %316 = vmatprep.subr.mxu0 0.0
      %317 = vmatpush1.msra.mxu0 0.0
      %318 = vmatprep.subr.mxu0 0.0
      %319 = vmatpush1.msra.mxu0 0.0
      %320 = vmatprep.subr.mxu0 0.0
      %321 = vmatpush1.msra.mxu0 0.0
      %322 = vmatprep.subr.mxu0 0.0
      %323 = vmatpush1.msra.mxu0 0.0
      %324 = vmatprep.subr.mxu0 0.0
      %325 = vmatpush1.msra.mxu0 0.0
      %326 = vmatprep.subr.mxu0 0.0
      %327 = vmatpush1.msra.mxu0 0.0
      %328 = vmatprep.subr.mxu0 0.0
      %329 = vmatpush1.msra.mxu0 0.0
      %330 = vmatprep.subr.mxu0 0.0
      %331 = vmatpush1.msra.mxu0 0.0
      %332 = vmatprep.subr.mxu0 0.0
      %333 = vmatpush1.msra.mxu0 0.0
      %334 = vmatprep.subr.mxu0 0.0
      %335 = vmatpush1.msra.mxu0 0.0
      %336 = vmatprep.subr.mxu0 0.0
      %337 = vmatpush1.msra.mxu0 0.0
      %338 = vmatprep.subr.mxu0 0.0
      %339 = vmatpush1.msra.mxu0 0.0
      %340 = vmatprep.subr.mxu0 0.0
      %341 = vmatpush1.msra.mxu0 0.0
      %342 = vmatprep.subr.mxu0 0.0
      %343 = vmatpush1.msra.mxu0 0.0
      %344 = vmatprep.subr.mxu0 0.0
      %345 = vmatpush1.msra.mxu0 0.0
      %346 = vmatprep.subr.mxu0 0.0
      %347 = vmatpush1.msra.mxu0 0.0
      %348 = vmatprep.subr.mxu0 0.0
      %349 = vmatpush1.msra.mxu0 0.0
      %350 = vmatprep.subr.mxu0 0.0
      %351 = vmatpush1.msra.mxu0 0.0
      %352 = vmatprep.subr.mxu0 0.0
      %353 = vmatpush1.msra.mxu0 0.0
      %354 = vmatprep.subr.mxu0 0.0
      %355 = vmatpush1.msra.mxu0 0.0
      %356 = vmatprep.subr.mxu0 0.0
      %357 = vmatpush1.msra.mxu0 0.0
      %358 = vmatprep.subr.mxu0 0.0
      %359 = vmatpush1.msra.mxu0 0.0
      %360 = vmatprep.subr.mxu0 0.0
      %361 = vmatpush1.msra.mxu0 0.0
      %362 = vmatprep.subr.mxu0 0.0
      %363 = vmatpush1.msra.mxu0 0.0
      %364 = vmatprep.subr.mxu0 0.0
      %365 = vmatpush1.msra.mxu0 0.0
      %366 = vmatprep.subr.mxu0 0.0
      %367 = vmatpush1.msra.mxu0 0.0
      %368 = vmatprep.mubr.f32.mxu0 0.0
      %369 = vmatmul.mubr.f32.gmra.mrb[0].mxu0 %v257
      %v370 = vpop.f32.mrb[0].mxu0
      %v371 = vadd.f32 %v253, %v370
      %v372 = vpop.f32.mrb[0].mxu0
      %373 = vmatprep.mubr.f32.mxu0 0.0
      %374 = vmatmul.mubr.f32.gmra.mrb[0].mxu0 %v260
      %v375 = vpop.f32.mrb[0].mxu0
      %v376 = vadd.f32 %v253, %v375
      %v377 = vpop.f32.mrb[0].mxu0
      %378 = vmatprep.mubr.f32.mxu0 0.0
      %379 = vmatmul.mubr.f32.gmra.mrb[0].mxu0 %v263
      %v380 = vpop.f32.mrb[0].mxu0
      %v381 = vadd.f32 %v253, %v380
      %v382 = vpop.f32.mrb[0].mxu0
      %383 = vmatprep.mubr.f32.mxu0 0.0
      %384 = vmatmul.mubr.f32.gmra.mrb[0].mxu0 %v266
      %v385 = vpop.f32.mrb[0].mxu0
      %v386 = vadd.f32 %v253, %v385
      %v387 = vpop.f32.mrb[0].mxu0
      %388 = vmatprep.mubr.f32.mxu0 0.0
      %389 = vmatmul.mubr.f32.gmra.mrb[0].mxu0 %v269
      %v390 = vpop.f32.mrb[0].mxu0
      %v391 = vadd.f32 %v253, %v390
      %v392 = vpop.f32.mrb[0].mxu0
      %393 = vmatprep.mubr.f32.mxu0 0.0
      %394 = vmatmul.mubr.f32.gmra.mrb[0].mxu0 %v272
      %v395 = vpop.f32.mrb[0].mxu0
      %v396 = vadd.f32 %v253, %v395
      %v397 = vpop.f32.mrb[0].mxu0
      %398 = vmatprep.mubr.f32.mxu0 0.0
      %399 = vmatmul.mubr.f32.gmra.mrb[0].mxu0 %v275
      %v400 = vpop.f32.mrb[0].mxu0
      %v401 = vadd.f32 %v253, %v400
      %v402 = vpop.f32.mrb[0].mxu0
      %403 = vmatprep.mubr.f32.mxu0 0.0
      %404 = vmatmul.mubr.f32.gmra.mrb[0].mxu0 %v278
      %v405 = vpop.f32.mrb[0].mxu0
      %v406 = vadd.f32 %v253, %v405
      %v407 = vpop.f32.mrb[0].mxu0
      %408 = vmatprep.mubr.f32.mxu0 0.0
      %409 = vmatmul.mubr.f32.gmra.mrb[0].mxu0 %v281
      %v410 = vpop.f32.mrb[0].mxu0
      %v411 = vadd.f32 %v253, %v410
      %v412 = vpop.f32.mrb[0].mxu0
      %413 = vmatprep.mubr.f32.mxu0 0.0
      %414 = vmatmul.mubr.f32.gmra.mrb[0].mxu0 %v284
      %v415 = vpop.f32.mrb[0].mxu0
      %v416 = vadd.f32 %v253, %v415
      %v417 = vpop.f32.mrb[0].mxu0
      %418 = vmatprep.mubr.f32.mxu0 0.0
      %419 = vmatmul.mubr.f32.gmra.mrb[0].mxu0 %v287
      %v420 = vpop.f32.mrb[0].mxu0
      %v421 = vadd.f32 %v253, %v420
      %v422 = vpop.f32.mrb[0].mxu0
      %423 = vmatprep.mubr.f32.mxu0 0.0
      %424 = vmatmul.mubr.f32.gmra.mrb[0].mxu0 %v290
      %v425 = vpop.f32.mrb[0].mxu0
      %v426 = vadd.f32 %v253, %v425
      %v427 = vpop.f32.mrb[0].mxu0
      %428 = vmatprep.mubr.f32.mxu0 0.0
      %429 = vmatmul.mubr.f32.gmra.mrb[0].mxu0 %v293
      %v430 = vpop.f32.mrb[0].mxu0
      %v431 = vadd.f32 %v253, %v430
      %v432 = vpop.f32.mrb[0].mxu0
      %433 = vmatprep.mubr.f32.mxu0 0.0
      %434 = vmatmul.mubr.f32.gmra.mrb[0].mxu0 %v296
      %v435 = vpop.f32.mrb[0].mxu0
      %v436 = vadd.f32 %v253, %v435
      %v437 = vpop.f32.mrb[0].mxu0
      %438 = vmatprep.mubr.f32.mxu0 0.0
      %439 = vmatmul.mubr.f32.gmra.mrb[0].mxu0 %v299
      %v440 = vpop.f32.mrb[0].mxu0
      %v441 = vadd.f32 %v253, %v440
      %v442 = vpop.f32.mrb[0].mxu0
      %443 = vmatprep.mubr.f32.mxu0 0.0
      %444 = vmatmul.mubr.f32.gmra.mrb[0].mxu0 %v302
      %v445 = vpop.f32.mrb[0].mxu0
      %v446 = vadd.f32 %v253, %v445
      %v447 = vpop.f32.mrb[0].mxu0
      %448 = vdwg.mxu0
      %v449 = vtanh.pop %v371
      %v450 = vtanh.pop %v376
      %v451 = vtanh.pop %v381
      %v452 = vtanh.pop %v386
      %v453 = vtanh.pop %v391
      %v454 = vtanh.pop %v396
      %v455 = vtanh.pop %v401
      %v456 = vtanh.pop %v406
      %v457 = vtanh.pop %v411
      %v458 = vtanh.pop %v416
      %v459 = vtanh.pop %v421
      %v460 = vtanh.pop %v426
      %v461 = vtanh.pop %v431
      %v462 = vtanh.pop %v436
      %v463 = vtanh.pop %v441
      %v464 = vtanh.pop %v446
      %v465 = vld [vmem:[%s3] sm:$0xff]
      %v466 = vld [vmem:[%s3 + $0x8] sm:$0xff]
      %v467 = vld [vmem:[%s3 + $0x10] sm:$0xff]
      %v468 = vld [vmem:[%s3 + $0x18] sm:$0xff]
      %v469 = vld [vmem:[%s3 + $0x20] sm:$0xff]
      %v470 = vld [vmem:[%s3 + $0x28] sm:$0xff]
      %v471 = vld [vmem:[%s3 + $0x30] sm:$0xff]
      %v472 = vld [vmem:[%s3 + $0x38] sm:$0xff]
      %v473 = vld [vmem:[%s3 + $0x40] sm:$0xff]
      %v474 = vld [vmem:[%s3 + $0x48] sm:$0xff]
      %v475 = vld [vmem:[%s3 + $0x50] sm:$0xff]
      %v476 = vld [vmem:[%s3 + $0x58] sm:$0xff]
      %v477 = vld [vmem:[%s3 + $0x60] sm:$0xff]
      %v478 = vld [vmem:[%s3 + $0x68] sm:$0xff]
      %v479 = vld [vmem:[%s3 + $0x70] sm:$0xff]
      %v480 = vld [vmem:[%s3 + $0x78] sm:$0xff]
      %v481 = vld [vmem:[%s4] sm:$0x1]
      %v483 = vlaneseq
      %v484 = vshrl.u32 %v483, 7
      %v485 = vsub.s32 0, %v484
      %v486 = vrot.slane %v481, %v485
      %488 = vmatprep.subr.mxu0 0.0
      %489 = vmatpush1.msra.mxu0 %v465
      %490 = vmatprep.subr.mxu0 0.0
      %491 = vmatpush1.msra.mxu0 %v466
      %492 = vmatprep.subr.mxu0 0.0
      %493 = vmatpush1.msra.mxu0 %v467
      %494 = vmatprep.subr.mxu0 0.0
      %495 = vmatpush1.msra.mxu0 %v468
      %496 = vmatprep.subr.mxu0 0.0
      %497 = vmatpush1.msra.mxu0 %v469
      %498 = vmatprep.subr.mxu0 0.0
      %499 = vmatpush1.msra.mxu0 %v470
      %500 = vmatprep.subr.mxu0 0.0
      %501 = vmatpush1.msra.mxu0 %v471
      %502 = vmatprep.subr.mxu0 0.0
      %503 = vmatpush1.msra.mxu0 %v472
      %504 = vmatprep.subr.mxu0 0.0
      %505 = vmatpush1.msra.mxu0 %v473
      %506 = vmatprep.subr.mxu0 0.0
      %507 = vmatpush1.msra.mxu0 %v474
      %508 = vmatprep.subr.mxu0 0.0
      %509 = vmatpush1.msra.mxu0 %v475
      %510 = vmatprep.subr.mxu0 0.0
      %511 = vmatpush1.msra.mxu0 %v476
      %512 = vmatprep.subr.mxu0 0.0
      %513 = vmatpush1.msra.mxu0 %v477
      %514 = vmatprep.subr.mxu0 0.0
      %515 = vmatpush1.msra.mxu0 %v478
      %516 = vmatprep.subr.mxu0 0.0
      %517 = vmatpush1.msra.mxu0 %v479
      %518 = vmatprep.subr.mxu0 0.0
      %519 = vmatpush1.msra.mxu0 %v480
      %520 = vmatprep.subr.mxu0 0.0
      %521 = vmatpush1.msra.mxu0 0.0
      %522 = vmatprep.subr.mxu0 0.0
      %523 = vmatpush1.msra.mxu0 0.0
      %524 = vmatprep.subr.mxu0 0.0
      %525 = vmatpush1.msra.mxu0 0.0
      %526 = vmatprep.subr.mxu0 0.0
      %527 = vmatpush1.msra.mxu0 0.0
      %528 = vmatprep.subr.mxu0 0.0
      %529 = vmatpush1.msra.mxu0 0.0
      %530 = vmatprep.subr.mxu0 0.0
      %531 = vmatpush1.msra.mxu0 0.0
      %532 = vmatprep.subr.mxu0 0.0
      %533 = vmatpush1.msra.mxu0 0.0
      %534 = vmatprep.subr.mxu0 0.0
      %535 = vmatpush1.msra.mxu0 0.0
      %536 = vmatprep.subr.mxu0 0.0
      %537 = vmatpush1.msra.mxu0 0.0
      %538 = vmatprep.subr.mxu0 0.0
      %539 = vmatpush1.msra.mxu0 0.0
      %540 = vmatprep.subr.mxu0 0.0
      %541 = vmatpush1.msra.mxu0 0.0
      %542 = vmatprep.subr.mxu0 0.0
      %543 = vmatpush1.msra.mxu0 0.0
      %544 = vmatprep.subr.mxu0 0.0
      %545 = vmatpush1.msra.mxu0 0.0
      %546 = vmatprep.subr.mxu0 0.0
      %547 = vmatpush1.msra.mxu0 0.0
      %548 = vmatprep.subr.mxu0 0.0
      %549 = vmatpush1.msra.mxu0 0.0
      %550 = vmatprep.subr.mxu0 0.0
      %551 = vmatpush1.msra.mxu0 0.0
      %552 = vmatprep.mubr.f32.mxu0 0.0
      %553 = vmatmul.mubr.f32.gmra.mrb[0].mxu0 %v449
      %v554 = vpop.f32.mrb[0].mxu0
      %v555 = vadd.f32 %v486, %v554
      %v556 = vpop.f32.mrb[0].mxu0
      %557 = vmatprep.mubr.f32.mxu0 0.0
      %558 = vmatmul.mubr.f32.gmra.mrb[0].mxu0 %v450
      %v559 = vpop.f32.mrb[0].mxu0
      %v560 = vadd.f32 %v486, %v559
      %v561 = vpop.f32.mrb[0].mxu0
      %562 = vmatprep.mubr.f32.mxu0 0.0
      %563 = vmatmul.mubr.f32.gmra.mrb[0].mxu0 %v451
      %v564 = vpop.f32.mrb[0].mxu0
      %v565 = vadd.f32 %v486, %v564
      %v566 = vpop.f32.mrb[0].mxu0
      %567 = vmatprep.mubr.f32.mxu0 0.0
      %568 = vmatmul.mubr.f32.gmra.mrb[0].mxu0 %v452
      %v569 = vpop.f32.mrb[0].mxu0
      %v570 = vadd.f32 %v486, %v569
      %v571 = vpop.f32.mrb[0].mxu0
      %572 = vmatprep.mubr.f32.mxu0 0.0
      %573 = vmatmul.mubr.f32.gmra.mrb[0].mxu0 %v453
      %v574 = vpop.f32.mrb[0].mxu0
      %v575 = vadd.f32 %v486, %v574
      %v576 = vpop.f32.mrb[0].mxu0
      %577 = vmatprep.mubr.f32.mxu0 0.0
      %578 = vmatmul.mubr.f32.gmra.mrb[0].mxu0 %v454
      %v579 = vpop.f32.mrb[0].mxu0
      %v580 = vadd.f32 %v486, %v579
      %v581 = vpop.f32.mrb[0].mxu0
      %582 = vmatprep.mubr.f32.mxu0 0.0
      %583 = vmatmul.mubr.f32.gmra.mrb[0].mxu0 %v455
      %v584 = vpop.f32.mrb[0].mxu0
      %v585 = vadd.f32 %v486, %v584
      %v586 = vpop.f32.mrb[0].mxu0
      %587 = vmatprep.mubr.f32.mxu0 0.0
      %588 = vmatmul.mubr.f32.gmra.mrb[0].mxu0 %v456
      %v589 = vpop.f32.mrb[0].mxu0
      %v590 = vadd.f32 %v486, %v589
      %v591 = vpop.f32.mrb[0].mxu0
      %592 = vmatprep.mubr.f32.mxu0 0.0
      %593 = vmatmul.mubr.f32.gmra.mrb[0].mxu0 %v457
      %v594 = vpop.f32.mrb[0].mxu0
      %v595 = vadd.f32 %v486, %v594
      %v596 = vpop.f32.mrb[0].mxu0
      %597 = vmatprep.mubr.f32.mxu0 0.0
      %598 = vmatmul.mubr.f32.gmra.mrb[0].mxu0 %v458
      %v599 = vpop.f32.mrb[0].mxu0
      %v600 = vadd.f32 %v486, %v599
      %v601 = vpop.f32.mrb[0].mxu0
      %602 = vmatprep.mubr.f32.mxu0 0.0
      %603 = vmatmul.mubr.f32.gmra.mrb[0].mxu0 %v459
      %v604 = vpop.f32.mrb[0].mxu0
      %v605 = vadd.f32 %v486, %v604
      %v606 = vpop.f32.mrb[0].mxu0
      %607 = vmatprep.mubr.f32.mxu0 0.0
      %608 = vmatmul.mubr.f32.gmra.mrb[0].mxu0 %v460
      %v609 = vpop.f32.mrb[0].mxu0
      %v610 = vadd.f32 %v486, %v609
      %v611 = vpop.f32.mrb[0].mxu0
      %612 = vmatprep.mubr.f32.mxu0 0.0
      %613 = vmatmul.mubr.f32.gmra.mrb[0].mxu0 %v461
      %v614 = vpop.f32.mrb[0].mxu0
      %v615 = vadd.f32 %v486, %v614
      %v616 = vpop.f32.mrb[0].mxu0
      %617 = vmatprep.mubr.f32.mxu0 0.0
      %618 = vmatmul.mubr.f32.gmra.mrb[0].mxu0 %v462
      %v619 = vpop.f32.mrb[0].mxu0
      %v620 = vadd.f32 %v486, %v619
      %v621 = vpop.f32.mrb[0].mxu0
      %622 = vmatprep.mubr.f32.mxu0 0.0
      %623 = vmatmul.mubr.f32.gmra.mrb[0].mxu0 %v463
      %v624 = vpop.f32.mrb[0].mxu0
      %v625 = vadd.f32 %v486, %v624
      %v626 = vpop.f32.mrb[0].mxu0
      %627 = vmatprep.mubr.f32.mxu0 0.0
      %628 = vmatmul.mubr.f32.gmra.mrb[0].mxu0 %v464
      %v629 = vpop.f32.mrb[0].mxu0
      %v630 = vadd.f32 %v486, %v629
      %v631 = vpop.f32.mrb[0].mxu0
      %632 = vdwg.mxu0
      %v633 = vlaneseq
      %v634 = vand.u32 %v633, 127
      %vm635 = vcmp.eq.s32.totalorder %v634, 16
      %v636 = vxor.u32 %v555, 2147483648
      %v637 = vxor.u32 %v560, 2147483648
      %v638 = vxor.u32 %v565, 2147483648
      %v639 = vxor.u32 %v570, 2147483648
      %v640 = vxor.u32 %v575, 2147483648
      %v641 = vxor.u32 %v580, 2147483648
      %v642 = vxor.u32 %v585, 2147483648
      %v643 = vxor.u32 %v590, 2147483648
      %v644 = vxor.u32 %v595, 2147483648
      %v645 = vxor.u32 %v600, 2147483648
      %v646 = vxor.u32 %v605, 2147483648
      %v647 = vxor.u32 %v610, 2147483648
      %v648 = vxor.u32 %v615, 2147483648
      %v649 = vxor.u32 %v620, 2147483648
      %v650 = vxor.u32 %v625, 2147483648
      %v651 = vxor.u32 %v630, 2147483648
      %v652 = vmul.f32 %v636, 1.442695
      %v653 = vpow.pop %v652
      %v654 = vmul.f32 %v637, 1.442695
      %v655 = vpow.pop %v654
      %v656 = vmul.f32 %v638, 1.442695
      %v657 = vpow.pop %v656
      %v658 = vmul.f32 %v639, 1.442695
      %v659 = vpow.pop %v658
      %v660 = vmul.f32 %v640, 1.442695
      %v661 = vpow.pop %v660
      %v662 = vmul.f32 %v641, 1.442695
      %v663 = vpow.pop %v662
      %v664 = vmul.f32 %v642, 1.442695
      %v665 = vpow.pop %v664
      %v666 = vmul.f32 %v643, 1.442695
      %v667 = vpow.pop %v666
      %v668 = vmul.f32 %v644, 1.442695
      %v669 = vpow.pop %v668
      %v670 = vmul.f32 %v645, 1.442695
      %v671 = vpow.pop %v670
      %v672 = vmul.f32 %v646, 1.442695
      %v673 = vpow.pop %v672
      %v674 = vmul.f32 %v647, 1.442695
      %v675 = vpow.pop %v674
      %v676 = vmul.f32 %v648, 1.442695
      %v677 = vpow.pop %v676
      %v678 = vmul.f32 %v649, 1.442695
      %v679 = vpow.pop %v678
      %v680 = vmul.f32 %v650, 1.442695
      %v681 = vpow.pop %v680
      %v682 = vmul.f32 %v651, 1.442695
      %v683 = vpow.pop %v682
      %v684 = vadd.f32 %v653, 1.0
      %v685 = vadd.f32 %v655, 1.0
      %v686 = vadd.f32 %v657, 1.0
      %v687 = vadd.f32 %v659, 1.0
      %v688 = vadd.f32 %v661, 1.0
      %v689 = vadd.f32 %v663, 1.0
      %v690 = vadd.f32 %v665, 1.0
      %v691 = vadd.f32 %v667, 1.0
      %v692 = vadd.f32 %v669, 1.0
      %v693 = vadd.f32 %v671, 1.0
      %v694 = vadd.f32 %v673, 1.0
      %v695 = vadd.f32 %v675, 1.0
      %v696 = vadd.f32 %v677, 1.0
      %v697 = vadd.f32 %v679, 1.0
      %v698 = vadd.f32 %v681, 1.0
      %v699 = vadd.f32 %v683, 1.0
      %v700 = vrcp.pop %v684
      %v701 = vmul.f32 1.0, %v700
      %v702 = vrcp.pop %v685
      %v703 = vmul.f32 1.0, %v702
      %v704 = vrcp.pop %v686
      %v705 = vmul.f32 1.0, %v704
      %v706 = vrcp.pop %v687
      %v707 = vmul.f32 1.0, %v706
      %v708 = vrcp.pop %v688
      %v709 = vmul.f32 1.0, %v708
      %v710 = vrcp.pop %v689
      %v711 = vmul.f32 1.0, %v710
      %v712 = vrcp.pop %v690
      %v713 = vmul.f32 1.0, %v712
      %v714 = vrcp.pop %v691
      %v715 = vmul.f32 1.0, %v714
      %v716 = vrcp.pop %v692
      %v717 = vmul.f32 1.0, %v716
      %v718 = vrcp.pop %v693
      %v719 = vmul.f32 1.0, %v718
      %v720 = vrcp.pop %v694
      %v721 = vmul.f32 1.0, %v720
      %v722 = vrcp.pop %v695
      %v723 = vmul.f32 1.0, %v722
      %v724 = vrcp.pop %v696
      %v725 = vmul.f32 1.0, %v724
      %v726 = vrcp.pop %v697
      %v727 = vmul.f32 1.0, %v726
      %v728 = vrcp.pop %v698
      %v729 = vmul.f32 1.0, %v728
      %v730 = vrcp.pop %v699
      %v731 = vmul.f32 1.0, %v730
      %v732 = vsel %vm635, %v555, %v701
      %v733 = vsel %vm635, %v560, %v703
      %v734 = vsel %vm635, %v565, %v705
      %v735 = vsel %vm635, %v570, %v707
      %v736 = vsel %vm635, %v575, %v709
      %v737 = vsel %vm635, %v580, %v711
      %v738 = vsel %vm635, %v585, %v713
      %v739 = vsel %vm635, %v590, %v715
      %v740 = vsel %vm635, %v595, %v717
      %v741 = vsel %vm635, %v600, %v719
      %v742 = vsel %vm635, %v605, %v721
      %v743 = vsel %vm635, %v610, %v723
      %v744 = vsel %vm635, %v615, %v725
      %v745 = vsel %vm635, %v620, %v727
      %v746 = vsel %vm635, %v625, %v729
      %v747 = vsel %vm635, %v630, %v731
      %748 = vst [vmem:[%s226] sm:$0xff] %v732
      %749 = vst [vmem:[%s226 + $0x8] sm:$0xff] %v733
      %750 = vst [vmem:[%s226 + $0x10] sm:$0xff] %v734
      %751 = vst [vmem:[%s226 + $0x18] sm:$0xff] %v735
      %752 = vst [vmem:[%s226 + $0x20] sm:$0xff] %v736
      %753 = vst [vmem:[%s226 + $0x28] sm:$0xff] %v737
      %754 = vst [vmem:[%s226 + $0x30] sm:$0xff] %v738
      %755 = vst [vmem:[%s226 + $0x38] sm:$0xff] %v739
      %756 = vst [vmem:[%s226 + $0x40] sm:$0xff] %v740
      %757 = vst [vmem:[%s226 + $0x48] sm:$0xff] %v741
      %758 = vst [vmem:[%s226 + $0x50] sm:$0xff] %v742
      %759 = vst [vmem:[%s226 + $0x58] sm:$0xff] %v743
      %760 = vst [vmem:[%s226 + $0x60] sm:$0xff] %v744
      %761 = vst [vmem:[%s226 + $0x68] sm:$0xff] %v745
      %762 = vst [vmem:[%s226 + $0x70] sm:$0xff] %v746
      %763 = vst [vmem:[%s226 + $0x78] sm:$0xff] %v747
      %s764 = smul.u32 16, %s16
      %p765 = scmp.lt.s32.totalorder %s764, 31
      %s766 = scalar_select %p765, %s764, 31
      %s767 = smul.addr %s766, 8
      %s768 = scalar_lea.vmem %s5, %s767
      // Predicated region
      $region41: #{encoder_m_forward.1} parent=39 // pred_check
        %p769 = pneg %p144
      $region42: #{encoder_m_forward.1} parent=39 // pred_check_branch
        %771 = sbr.rel (%p769) target = $region44
      $region43: #{encoder_m_forward.1} parent=39 // pred_region
        %s772 = smul.u32 16, %s16
      $region44: #{encoder_m_forward.1} parent=39 // pred_fallthru
        _
    $region40: #{encoder_m_forward.1} parent=5 // pred_fallthru
      _
    %p773 = scmp.le.s32.totalorder 2, %s11
    // Predicated region
    $region45: #{encoder_m_forward.1} parent=5 // pred_check
      %p774 = pneg %p773
    $region46: #{encoder_m_forward.1} parent=5 // pred_check_branch
      %776 = sbr.rel (%p774) target = $region48
    $region47: #{encoder_m_forward.1} parent=5 // pred_region
      %s777 = ssub.s32 %s11, 2
      // Predicated region
      $region49: #{encoder_m_forward.1} parent=47 // pred_check
        %p778 = pneg %p150
      $region50: #{encoder_m_forward.1} parent=47 // pred_check_branch
        %780 = sbr.rel (%p778) target = $region52
      $region51: #{encoder_m_forward.1} parent=47 // pred_region
        %s781 = smul.u32 16, %s17
        %p782 = scmp.lt.s32.totalorder %s781, 31
        %s783 = scalar_select %p782, %s781, 31
        %s784 = smul.addr %s783, 8
        %s785 = scalar_lea.vmem %s5, %s784
      $region52: #{encoder_m_forward.1} parent=47 // pred_fallthru
        _
    $region48: #{encoder_m_forward.1} parent=5 // pred_fallthru
      _
  $region6: #{encoder_m_forward.1} parent=0 // loop_footer
    %s15 = sadd.s32 1, %s11
  $region7: #{encoder_m_forward.1} parent=0 // loop_footer_branch
    %10 = sbr.rel target = $region3
  $region8: #{encoder_m_forward.1} parent=0 // loop_exit
    _

</llo_original>
